<compile_context>
chip_gen: v5e
topology: v5e:2x2
jax: 0.10.0
libtpu: 0.0.40
codegen_flags: <defaults>
</compile_context>

<pallas_src>
import jax
import jax.numpy as jnp
from jax.experimental import pallas as pl
from jax.experimental.pallas import tpu as pltpu


def _cosine_simi_kernel(x_ref, y_ref, o_ref):
    # x_ref, y_ref: (1, C, TB, 128) blocks in VMEM; o_ref: (1, 1, TB, 128)
    x = x_ref[...]
    y = y_ref[...]
    if x.dtype != jnp.float32:          # allow bf16 inputs; reduce in f32
        x = x.astype(jnp.float32)
        y = y.astype(jnp.float32)

    # Current PyTorch clamps each norm at eps = 1e-8 separately:
    #   denom = max(||x||, eps) * max(||y||, eps)
    # max(sqrt(a), eps) == sqrt(max(a, eps^2)) -> clamp squared norms at eps^2
    # and use rsqrt (EUP) instead of two sqrts + a divide.
    eps2 = jnp.float32(1e-16)

    # C is a leading "plane" axis here, so these reductions are elementwise
    # adds across C dense (TB, 128) planes -> full vreg utilization even for
    # tiny C.
    dot = jnp.sum(x * y, axis=1, keepdims=True)      # (1, 1, TB, 128)
    xn2 = jnp.sum(x * x, axis=1, keepdims=True)
    yn2 = jnp.sum(y * y, axis=1, keepdims=True)

    inv_norm = (jax.lax.rsqrt(jnp.maximum(xn2, eps2)) *
                jax.lax.rsqrt(jnp.maximum(yn2, eps2)))
    cos = dot * inv_norm

    # 1 - sigmoid(c) == 1 / (1 + exp(c)); exact divide (free: kernel is HBM-bound).
    o_ref[...] = (1.0 / (1.0 + jnp.exp(cos))).astype(o_ref.dtype)


def _vmem_budget_bytes():
    """Generation-aware (input pipeline budget, vmem_limit_bytes or None)."""
    try:
        kind = jax.devices()[0].device_kind.lower()
    except Exception:
        kind = ""
    if "v7" in kind:
        # v7x: 64 MiB VMEM per TensorCore -> keep the total working set well
        # under ~48 MiB (2 inputs x 2 buffers ~ 24 MiB + outputs + headroom).
        return 24 * 1024 * 1024, 48 * 1024 * 1024
    if "v6" in kind:
        # v6e: 128 MiB physical VMEM -> wider tiles cut per-step overhead.
        return 24 * 1024 * 1024, 64 * 1024 * 1024
    # v5e / unknown: default scoped VMEM is 16 MiB -> stay near 12 MiB.
    return 12 * 1024 * 1024, None


def _pick_sublane_tile(SB, C, itemsize, budget):
    """Largest sublane tile TB (multiple of 8, or the full SB) such that the
    double-buffered input working set 2 inputs x 2 buffers x C x TB x 128 x
    itemsize stays within `budget`.  No divisibility requirement on SB: the
    grid uses cdiv with a masked partial last block."""
    max_tb = budget // (4 * C * 128 * itemsize)
    max_tb = (max_tb // 8) * 8
    if max_tb < 8:
        # TODO(synk): for very large C (>= ~4096 f32) add a trailing
        # "arbitrary" C-reduction grid axis with f32 VMEM accumulators instead
        # of clamping the tile here.
        max_tb = 8
    if SB <= max_tb:
        return SB          # whole SB axis in one block (block == full dim is legal)
    return max_tb


def cosine_simi(x, y):
    """Pallas TPU forward of the PyTorch `cosine_simi` module.

    x, y: (B, C, W, H). Returns (B, 1, W, H) float32 = 1 - sigmoid(cos_sim(x, y, dim=1)).
    """
    assert x.shape == y.shape
    B, C, W, H = x.shape
    S = W * H

    # Dense spatial planes: pad S to a multiple of 128 and view as (B, C, SB, 128).
    SB = pl.cdiv(S, 128)
    S_pad = SB * 128
    x3 = x.reshape(B, C, S)
    y3 = y.reshape(B, C, S)
    if S_pad != S:
        pad = S_pad - S
        x3 = jnp.pad(x3, ((0, 0), (0, 0), (0, pad)))
        y3 = jnp.pad(y3, ((0, 0), (0, 0), (0, pad)))
    x4 = x3.reshape(B, C, SB, 128)
    y4 = y3.reshape(B, C, SB, 128)

    budget, vmem_limit = _vmem_budget_bytes()
    TB = _pick_sublane_tile(SB, C, x4.dtype.itemsize, budget)

    # Guarantee >= 2 grid steps so both v7x TensorCores get work under
    # ("parallel", "parallel") megacore sharding; tiles stay lane-dense.
    while B * pl.cdiv(SB, TB) < 2 and TB > 8:
        TB = max(8, ((TB // 2) // 8) * 8)

    grid = (B, pl.cdiv(SB, TB))

    cp_kwargs = dict(dimension_semantics=("parallel", "parallel"))
    if vmem_limit is not None:
        cp_kwargs["vmem_limit_bytes"] = vmem_limit

    out = pl.pallas_call(
        _cosine_simi_kernel,
        out_shape=jax.ShapeDtypeStruct((B, 1, SB, 128), jnp.float32),
        grid_spec=pltpu.PrefetchScalarGridSpec(
            num_scalar_prefetch=0,
            grid=grid,
            in_specs=[
                pl.BlockSpec((1, C, TB, 128), lambda b, s: (b, 0, s, 0)),
                pl.BlockSpec((1, C, TB, 128), lambda b, s: (b, 0, s, 0)),
            ],
            out_specs=pl.BlockSpec((1, 1, TB, 128), lambda b, s: (b, 0, s, 0)),
        ),
        compiler_params=pltpu.CompilerParams(**cp_kwargs),
    )(x4, y4)

    out = out.reshape(B, 1, S_pad)[:, :, :S]
    return out.reshape(B, 1, W, H)


if __name__ == "__main__":
    key = jax.random.PRNGKey(0)
    kx, ky = jax.random.split(key)

    B, C, W, H = 2, 4, 16, 16
    x = jax.random.normal(kx, (B, C, W, H), dtype=jnp.float32)
    y = jax.random.normal(ky, (B, C, W, H), dtype=jnp.float32)

    out = jax.block_until_ready(cosine_simi(x, y))

    # Pure-JAX reference with torch.cosine_similarity semantics.
    eps = 1e-8
    dot = jnp.sum(x * y, axis=1, keepdims=True)
    xn = jnp.maximum(jnp.sqrt(jnp.sum(x * x, axis=1, keepdims=True)), eps)
    yn = jnp.maximum(jnp.sqrt(jnp.sum(y * y, axis=1, keepdims=True)), eps)
    ref = 1.0 - jax.nn.sigmoid(dot / (xn * yn))

    assert out.shape == (B, 1, W, H)
    assert jnp.allclose(out, ref, atol=1e-3, rtol=1e-3), float(jnp.max(jnp.abs(out - ref)))

    print("KERNEL_OK")
</pallas_src>

<mosaic_0001>
module attributes {stable_mosaic.version = 11 : i64} {
  func.func @_cosine_simi_kernel(%arg0: i32, %arg1: i32, %arg2: memref<1x4x2x128xf32, #tpu.memory_space<vmem>>, %arg3: memref<1x4x2x128xf32, #tpu.memory_space<vmem>>, %arg4: memref<1x1x2x128xf32, #tpu.memory_space<vmem>>) attributes {dimension_semantics = [#tpu.dimension_semantics<parallel>, #tpu.dimension_semantics<parallel>], iteration_bounds = array<i64: 2, 1>, scalar_prefetch = 0 : i64, scratch_operands = 0 : i64, tpu.core_type = #tpu.core_type<tc>, window_params = [{transform_indices = @transform_0, window_bounds = array<i64: 1, 4, 2, 128>}, {transform_indices = @transform_1, window_bounds = array<i64: 1, 4, 2, 128>}, {transform_indices = @transform_2, window_bounds = array<i64: 1, 1, 2, 128>}]} {
    %c0 = arith.constant 0 : index
    %c0_0 = arith.constant 0 : index
    %c0_1 = arith.constant 0 : index
    %c0_2 = arith.constant 0 : index
    %0 = vector.load %arg2[%c0, %c0_0, %c0_1, %c0_2] : memref<1x4x2x128xf32, #tpu.memory_space<vmem>>, vector<1x4x2x128xf32>
    %c0_3 = arith.constant 0 : index
    %c0_4 = arith.constant 0 : index
    %c0_5 = arith.constant 0 : index
    %c0_6 = arith.constant 0 : index
    %1 = vector.load %arg3[%c0_3, %c0_4, %c0_5, %c0_6] : memref<1x4x2x128xf32, #tpu.memory_space<vmem>>, vector<1x4x2x128xf32>
    %2 = arith.mulf %0, %1 : vector<1x4x2x128xf32>
    %cst = arith.constant dense<0.000000e+00> : vector<1x2x128xf32>
    %3 = vector.multi_reduction <add>, %2, %cst [1] : vector<1x4x2x128xf32> to vector<1x2x128xf32>
    %4 = vector.shape_cast %3 : vector<1x2x128xf32> to vector<1x1x2x128xf32>
    %5 = arith.mulf %0, %0 : vector<1x4x2x128xf32>
    %cst_7 = arith.constant dense<0.000000e+00> : vector<1x2x128xf32>
    %6 = vector.multi_reduction <add>, %5, %cst_7 [1] : vector<1x4x2x128xf32> to vector<1x2x128xf32>
    %7 = vector.shape_cast %6 : vector<1x2x128xf32> to vector<1x1x2x128xf32>
    %8 = arith.mulf %1, %1 : vector<1x4x2x128xf32>
    %cst_8 = arith.constant dense<0.000000e+00> : vector<1x2x128xf32>
    %9 = vector.multi_reduction <add>, %8, %cst_8 [1] : vector<1x4x2x128xf32> to vector<1x2x128xf32>
    %10 = vector.shape_cast %9 : vector<1x2x128xf32> to vector<1x1x2x128xf32>
    %cst_9 = arith.constant 1.000000e-16 : f32
    %11 = vector.broadcast %cst_9 : f32 to vector<1x1x2x128xf32>
    %12 = arith.maximumf %7, %11 : vector<1x1x2x128xf32>
    %13 = math.rsqrt %12 : vector<1x1x2x128xf32>
    %cst_10 = arith.constant 1.000000e-16 : f32
    %14 = vector.broadcast %cst_10 : f32 to vector<1x1x2x128xf32>
    %15 = arith.maximumf %10, %14 : vector<1x1x2x128xf32>
    %16 = math.rsqrt %15 : vector<1x1x2x128xf32>
    %17 = arith.mulf %13, %16 : vector<1x1x2x128xf32>
    %18 = arith.mulf %4, %17 : vector<1x1x2x128xf32>
    %19 = math.exp %18 : vector<1x1x2x128xf32>
    %cst_11 = arith.constant 1.000000e+00 : f32
    %20 = vector.broadcast %cst_11 : f32 to vector<1x1x2x128xf32>
    %21 = arith.addf %20, %19 : vector<1x1x2x128xf32>
    %cst_12 = arith.constant 1.000000e+00 : f32
    %22 = vector.broadcast %cst_12 : f32 to vector<1x1x2x128xf32>
    %23 = arith.divf %22, %21 : vector<1x1x2x128xf32>
    %c0_13 = arith.constant 0 : index
    %c0_14 = arith.constant 0 : index
    %c0_15 = arith.constant 0 : index
    %c0_16 = arith.constant 0 : index
    %24 = vector.load %arg4[%c0_13, %c0_14, %c0_15, %c0_16] : memref<1x1x2x128xf32, #tpu.memory_space<vmem>>, vector<1x1x2x128xf32>
    tpu.vector_store %arg4[%c0_13, %c0_14, %c0_15, %c0_16], %23 {strides = array<i32>} : memref<1x1x2x128xf32, #tpu.memory_space<vmem>>, vector<1x1x2x128xf32>,
    return
  }
  func.func @transform_0(%arg0: i32, %arg1: i32) -> (i32, i32, i32, i32) {
    %c0_i32 = arith.constant 0 : i32
    %c0_i32_0 = arith.constant 0 : i32
    %c0_i32_1 = arith.constant 0 : i32
    return %arg0, %c0_i32, %arg1, %c0_i32_0 : i32, i32, i32, i32
  }
  func.func @transform_1(%arg0: i32, %arg1: i32) -> (i32, i32, i32, i32) {
    %c0_i32 = arith.constant 0 : i32
    %c0_i32_0 = arith.constant 0 : i32
    %c0_i32_1 = arith.constant 0 : i32
    return %arg0, %c0_i32, %arg1, %c0_i32_0 : i32, i32, i32, i32
  }
  func.func @transform_2(%arg0: i32, %arg1: i32) -> (i32, i32, i32, i32) {
    %c0_i32 = arith.constant 0 : i32
    %c0_i32_0 = arith.constant 0 : i32
    %c0_i32_1 = arith.constant 0 : i32
    return %arg0, %c0_i32, %arg1, %c0_i32_0 : i32, i32, i32, i32
  }
}

</mosaic_0001>

<llo_original>
// kernel: tpu_custom_call.1
$region0: #{tpu_custom_call.1}
  #allocation0 [shape = 'u32[]', space=smem, size = 0x4, offset = 0x4, fixed_abs, tag = 'smem constant byte address 0x4 - core index']
  #allocation1 [shape = 'u32[72,128]{1,0:T(1,128)}', space=vmem, size = 0x9000, scoped, tag = 'internal scratch']
  %s0 = inlined_call_operand.hbm [shape: f32[2,4,2,128], index: 0, kind: input, shape index: {}]
  %s1 = inlined_call_operand.hbm [shape: f32[2,4,2,128], index: 1, kind: input, shape index: {}]
  %s2 = inlined_call_operand.hbm [shape: f32[2,1,2,128], index: 2, kind: output, shape index: {}]
  %s3 = sld [smem:[#allocation0]]
  $region49: #{tpu_custom_call.1} parent=0
    _
  %s5 = ssub.s32 1, %s3
  %s6 = scalar_select 0, %s5, %s3
  $region1: #{tpu_custom_call.1} parent=0
    #allocation2 [shape = 'u8[8192]{0}', space=vmem, size = 0x2000, scoped, tag = 'input window, operand 0']
    #allocation3 [shape = 's32[2]{0}', space=sflag, size = 0x8, scoped, tag = 'scoped memory for tpu_custom_call.1']
    #allocation4 [shape = 's32[2]{0}', space=sflag, size = 0x8, scoped, tag = 'scoped memory for tpu_custom_call.1']
    #allocation5 [shape = 'u8[8192]{0}', space=vmem, size = 0x2000, scoped, tag = 'input window, operand 1']
    #allocation6 [shape = 's32[2]{0}', space=sflag, size = 0x8, scoped, tag = 'scoped memory for tpu_custom_call.1']
    #allocation7 [shape = 'u8[2048]{0}', space=vmem, size = 0x800, scoped, tag = 'output window, operand 0']
    %7 = vsyncpa [#allocation3], 0
    %s8 = scalar_lea.sflag [#allocation3], 1
    %9 = vsyncpa %s8, 0
    %10 = vsyncpa [#allocation6], 0
    %s11 = scalar_lea.sflag [#allocation6], 1
    %12 = vsyncpa %s11, 0
    %13 = vsyncpa [#allocation4], 0
    %s14 = scalar_lea.sflag [#allocation4], 1
    %15 = vsyncpa %s14, 0
    loop: start=0, step=1, limit=4
    $region2: #{tpu_custom_call.1} parent=1 // loop_pre_header
      _
    $region3: #{tpu_custom_call.1} parent=1 // loop_header
      %s17 = sphi 0, %s21
      %p18 = scmp.ge.s32.totalorder %s17, 4
      %s24 = sphi 0, %s36
      %s25 = sphi 0, %s32
      %s26 = sphi 0, %s24
      %s27 = sphi 0, %s25
      %s28 = sphi 0, %s26
      %s29 = sphi 0, %s27
      %s41 = sphi 0, %s43
      %s44 = sphi 0, %s41
      %s45 = sphi 0, %s44
      %s61 = sphi 0, %s45
      %s69 = sphi 0, %s71
      %s72 = sphi 0, %s69
      %s73 = sphi 0, %s72
      %s89 = sphi 0, %s73
      %s97 = sphi 0, %s99
      %s100 = sphi 0, %s97
      %s101 = sphi 0, %s100
      %s117 = sphi 0, %s101
    $region4: #{tpu_custom_call.1} parent=1 // loop_header_branch
      %20 = sbr.rel (%p18) target = $region8
    $region5: #{tpu_custom_call.1} parent=1 // loop_body
      %s22 = ssub.s32 %s17, 1
      %s23 = ssub.s32 %s17, 2
      %s30 = sadd.s32 1, %s25
      %p31 = scmp.ge.s32.totalorder %s30, 1
      %s32 = scalar_select %p31, 0, %s30
      %s33 = sadd.s32 1, %s24
      %s34 = scalar_select %p31, %s33, %s24
      %p35 = scmp.ge.s32.totalorder %s34, 2
      %s36 = scalar_select %p35, 0, %s34
      %s37 = ssub.s32 %s24, %s36
      %s38 = ssub.s32 %s25, %s32
      %s39 = sor.u32 %s37, %s38
      %p40 = scmp.eq.s32.totalorder %s39, 0
      %s42 = sadd.s32 %s41, 1
      %s43 = scalar_select %p40, %s41, %s42
      %p46 = pneg %p40
      %p47 = scmp.eq.s32.totalorder %s17, 1
      %p48 = por %p46, %p47
      %p49 = scmp.ne.s32.totalorder %s41, %s44
      %p50 = scmp.eq.s32.totalorder %s17, 0
      %p51 = por %p49, %p50
      %p52 = scmp.ne.s32.totalorder %s41, %s44
      %p53 = scmp.eq.s32.totalorder %s22, 1
      %p54 = por %p52, %p53
      %p55 = scmp.ne.s32.totalorder %s44, %s45
      %p56 = scmp.eq.s32.totalorder %s22, 0
      %p57 = por %p55, %p56
      %p58 = scmp.ne.s32.totalorder %s44, %s45
      %p59 = scmp.eq.s32.totalorder %s23, 1
      %p60 = por %p58, %p59
      %p62 = scmp.ne.s32.totalorder %s45, %s61
      %p63 = scmp.eq.s32.totalorder %s23, 0
      %p64 = por %p62, %p63
      %s65 = ssub.s32 %s24, %s36
      %s66 = ssub.s32 %s25, %s32
      %s67 = sor.u32 %s65, %s66
      %p68 = scmp.eq.s32.totalorder %s67, 0
      %s70 = sadd.s32 %s69, 1
      %s71 = scalar_select %p68, %s69, %s70
      %p74 = pneg %p68
      %p75 = scmp.eq.s32.totalorder %s17, 1
      %p76 = por %p74, %p75
      %p77 = scmp.ne.s32.totalorder %s69, %s72
      %p78 = scmp.eq.s32.totalorder %s17, 0
      %p79 = por %p77, %p78
      %p80 = scmp.ne.s32.totalorder %s69, %s72
      %p81 = scmp.eq.s32.totalorder %s22, 1
      %p82 = por %p80, %p81
      %p83 = scmp.ne.s32.totalorder %s72, %s73
      %p84 = scmp.eq.s32.totalorder %s22, 0
      %p85 = por %p83, %p84
      %p86 = scmp.ne.s32.totalorder %s72, %s73
      %p87 = scmp.eq.s32.totalorder %s23, 1
      %p88 = por %p86, %p87
      %p90 = scmp.ne.s32.totalorder %s73, %s89
      %p91 = scmp.eq.s32.totalorder %s23, 0
      %p92 = por %p90, %p91
      %s93 = ssub.s32 %s24, %s36
      %s94 = ssub.s32 %s25, %s32
      %s95 = sor.u32 %s93, %s94
      %p96 = scmp.eq.s32.totalorder %s95, 0
      %s98 = sadd.s32 %s97, 1
      %s99 = scalar_select %p96, %s97, %s98
      %p102 = pneg %p96
      %p103 = scmp.eq.s32.totalorder %s17, 1
      %p104 = por %p102, %p103
      %p105 = scmp.ne.s32.totalorder %s97, %s100
      %p106 = scmp.eq.s32.totalorder %s17, 0
      %p107 = por %p105, %p106
      %p108 = scmp.ne.s32.totalorder %s97, %s100
      %p109 = scmp.eq.s32.totalorder %s22, 1
      %p110 = por %p108, %p109
      %p111 = scmp.ne.s32.totalorder %s100, %s101
      %p112 = scmp.eq.s32.totalorder %s22, 0
      %p113 = por %p111, %p112
      %p114 = scmp.ne.s32.totalorder %s100, %s101
      %p115 = scmp.eq.s32.totalorder %s23, 1
      %p116 = por %p114, %p115
      %p118 = scmp.ne.s32.totalorder %s101, %s117
      %p119 = scmp.eq.s32.totalorder %s23, 0
      %p120 = por %p118, %p119
      %p121 = scmp.le.s32.totalorder 1, %s17
      %p122 = scmp.lt.s32.totalorder %s17, 3
      %p123 = pnand %p121, %p122
      %p124 = pneg %p123
      // Predicated region
      $region9: #{tpu_custom_call.1} parent=5 // pred_check
        _
      $region10: #{tpu_custom_call.1} parent=5 // pred_check_branch
        %126 = sbr.rel (%p123) target = $region12
      $region11: #{tpu_custom_call.1} parent=5 // pred_region
        %s127 = ssub.s32 %s17, 1
      $region12: #{tpu_custom_call.1} parent=5 // pred_fallthru
        _
      %p128 = scmp.lt.s32.totalorder %s17, 2
      // Predicated region
      $region13: #{tpu_custom_call.1} parent=5 // pred_check
        %p129 = pneg %p128
      $region14: #{tpu_custom_call.1} parent=5 // pred_check_branch
        %131 = sbr.rel (%p129) target = $region16
      $region15: #{tpu_custom_call.1} parent=5 // pred_region
        // Predicated region
        $region17: #{tpu_custom_call.1} parent=15 // pred_check
          %p132 = pneg %p51
        $region18: #{tpu_custom_call.1} parent=15 // pred_check_branch
          %134 = sbr.rel (%p132) target = $region20
        $region19: #{tpu_custom_call.1} parent=15 // pred_region
          %s135 = sand.u32 %s41, 1
          %s136 = scalar_lea.sflag [#allocation3], %s135
          %s137 = sand.u32 %s41, 1
          %s138 = smul.addr %s137, 8
          %s139 = scalar_lea.vmem [#allocation2], %s138
          %141 = vsyncadd %s136, 0
          %s142 = smul.addr %s24, 4
          %s143 = sadd.s32 %s25, %s142
          %s144 = smul.addr %s143, 2
          %s145 = scalar_lea.hbm %s0, %s144
          %s146 = sshll.u32 %s145, 4
          %s147 = int_to_ptr.hbm [resolvable:$true] %s146
          %s148 = sshll.u32 %s139, 4
          %s149 = int_to_ptr.vmem [resolvable:$true] %s148
          %154 = dma.hbm_to_vmem [thread:$0]  %s147, 128, %s149, %s136, 32, 32, 2
        $region20: #{tpu_custom_call.1} parent=15 // pred_fallthru
          _
        // Predicated region
        $region21: #{tpu_custom_call.1} parent=15 // pred_check
          %p155 = pneg %p79
        $region22: #{tpu_custom_call.1} parent=15 // pred_check_branch
          %157 = sbr.rel (%p155) target = $region24
        $region23: #{tpu_custom_call.1} parent=15 // pred_region
          %s158 = sand.u32 %s69, 1
          %s159 = scalar_lea.sflag [#allocation6], %s158
          %s160 = sand.u32 %s69, 1
          %s161 = smul.addr %s160, 8
          %s162 = scalar_lea.vmem [#allocation5], %s161
          %164 = vsyncadd %s159, 0
          %s165 = smul.addr %s24, 4
          %s166 = sadd.s32 %s25, %s165
          %s167 = smul.addr %s166, 2
          %s168 = scalar_lea.hbm %s1, %s167
          %s169 = sshll.u32 %s168, 4
          %s170 = int_to_ptr.hbm [resolvable:$true] %s169
          %s171 = sshll.u32 %s162, 4
          %s172 = int_to_ptr.vmem [resolvable:$true] %s171
          %177 = dma.hbm_to_vmem [thread:$0]  %s170, 128, %s172, %s159, 32, 32, 2
        $region24: #{tpu_custom_call.1} parent=15 // pred_fallthru
          _
      $region16: #{tpu_custom_call.1} parent=5 // pred_fallthru
        _
      %p178 = scmp.le.s32.totalorder 1, %s17
      %p179 = scmp.lt.s32.totalorder %s17, 3
      %p180 = pnand %p178, %p179
      %p181 = pneg %p180
      // Predicated region
      $region25: #{tpu_custom_call.1} parent=5 // pred_check
        _
      $region26: #{tpu_custom_call.1} parent=5 // pred_check_branch
        %183 = sbr.rel (%p180) target = $region28
      $region27: #{tpu_custom_call.1} parent=5 // pred_region
        %s184 = ssub.s32 %s17, 1
        %s185 = sand.u32 %s44, 1
        %s186 = scalar_lea.sflag [#allocation3], %s185
        %s187 = sand.u32 %s44, 1
        %s188 = smul.addr %s187, 8
        %s189 = scalar_lea.vmem [#allocation2], %s188
        // Predicated region
        $region29: #{tpu_custom_call.1} parent=27 // pred_check
          %p190 = pneg %p57
        $region30: #{tpu_custom_call.1} parent=27 // pred_check_branch
          %192 = sbr.rel (%p190) target = $region32
        $region31: #{tpu_custom_call.1} parent=27 // pred_region
          %194 = dma.done %s186, 128
        $region32: #{tpu_custom_call.1} parent=27 // pred_fallthru
          _
        %s195 = sand.u32 %s72, 1
        %s196 = scalar_lea.sflag [#allocation6], %s195
        %s197 = sand.u32 %s72, 1
        %s198 = smul.addr %s197, 8
        %s199 = scalar_lea.vmem [#allocation5], %s198
        // Predicated region
        $region33: #{tpu_custom_call.1} parent=27 // pred_check
          %p200 = pneg %p85
        $region34: #{tpu_custom_call.1} parent=27 // pred_check_branch
          %202 = sbr.rel (%p200) target = $region36
        $region35: #{tpu_custom_call.1} parent=27 // pred_region
          %204 = dma.done %s196, 128
        $region36: #{tpu_custom_call.1} parent=27 // pred_fallthru
          _
        %s205 = sand.u32 %s44, 1
        %s206 = scalar_lea.sflag [#allocation3], %s205
        %s207 = sand.u32 %s44, 1
        %s208 = smul.addr %s207, 8
        %s209 = scalar_lea.vmem [#allocation2], %s208
        %p210 = pneg %p57
        %p211 = pneg %p54
        %s212 = sand.u32 %s72, 1
        %s213 = scalar_lea.sflag [#allocation6], %s212
        %s214 = sand.u32 %s72, 1
        %s215 = smul.addr %s214, 8
        %s216 = scalar_lea.vmem [#allocation5], %s215
        %p217 = pneg %p85
        %p218 = pneg %p82
        %p219 = pneg %p113
        %p220 = pneg %p110
        %s221 = sand.u32 %s100, 1
        %s222 = scalar_lea.sflag [#allocation4], %s221
        %s223 = sand.u32 %s100, 1
        %s224 = smul.addr %s223, 2
        %s225 = scalar_lea.vmem [#allocation7], %s224
        %v226 = vld [vmem:[%s189] sm:$0x3]
        %v227 = vld [vmem:[%s189 + $0x2] sm:$0x3]
        %v228 = vld [vmem:[%s189 + $0x4] sm:$0x3]
        %v229 = vld [vmem:[%s189 + $0x6] sm:$0x3]
        %v230 = vld [vmem:[%s199] sm:$0x3]
        %v231 = vld [vmem:[%s199 + $0x2] sm:$0x3]
        %v232 = vld [vmem:[%s199 + $0x4] sm:$0x3]
        %v233 = vld [vmem:[%s199 + $0x6] sm:$0x3]
        %v234 = vmul.f32 %v226, %v230
        %v235 = vmul.f32 %v227, %v231
        %v236 = vmul.f32 %v228, %v232
        %v237 = vmul.f32 %v229, %v233
        %vm238 = vcmask 1041408
        %v239 = vsel %vm238, %v234, 0.0
        %v240 = vsel %vm238, %v235, 0.0
        %v241 = vadd.f32 %v239, %v240
        %v242 = vsel %vm238, %v236, 0.0
        %v243 = vadd.f32 %v241, %v242
        %v244 = vsel %vm238, %v237, 0.0
        %v245 = vadd.f32 %v243, %v244
        %v246 = vmul.f32 %v226, %v226
        %v247 = vmul.f32 %v227, %v227
        %v248 = vmul.f32 %v228, %v228
        %v249 = vmul.f32 %v229, %v229
        %v250 = vsel %vm238, %v246, 0.0
        %v251 = vsel %vm238, %v247, 0.0
        %v252 = vadd.f32 %v250, %v251
        %v253 = vsel %vm238, %v248, 0.0
        %v254 = vadd.f32 %v252, %v253
        %v255 = vsel %vm238, %v249, 0.0
        %v256 = vadd.f32 %v254, %v255
        %v257 = vmul.f32 %v230, %v230
        %v258 = vmul.f32 %v231, %v231
        %v259 = vmul.f32 %v232, %v232
        %v260 = vmul.f32 %v233, %v233
        %v261 = vsel %vm238, %v257, 0.0
        %v262 = vsel %vm238, %v258, 0.0
        %v263 = vadd.f32 %v261, %v262
        %v264 = vsel %vm238, %v259, 0.0
        %v265 = vadd.f32 %v263, %v264
        %v266 = vsel %vm238, %v260, 0.0
        %v267 = vadd.f32 %v265, %v266
        %v268 = vmax.f32 %v256, 1e-16
        %v269 = vrsqrt.pop %v268
        %v270 = vmul.f32 %v269, %v268
        %v271 = vmul.f32 %v270, %v269
        %v272 = vmul.f32 0.5, %v271
        %v273 = vsub.f32 1.5, %v272
        %v274 = vmul.f32 %v269, %v273
        %vm275 = vweird.f32 %v268
        %vm276 = vweird.f32 %v269
        %vm277 = vmor %vm275, %vm276
        %v278 = vsel %vm277, %v269, %v274
        %v279 = vmax.f32 %v267, 1e-16
        %v280 = vrsqrt.pop %v279
        %v281 = vmul.f32 %v280, %v279
        %v282 = vmul.f32 %v281, %v280
        %v283 = vmul.f32 0.5, %v282
        %v284 = vsub.f32 1.5, %v283
        %v285 = vmul.f32 %v280, %v284
        %vm286 = vweird.f32 %v279
        %vm287 = vweird.f32 %v280
        %vm288 = vmor %vm286, %vm287
        %v289 = vsel %vm288, %v280, %v285
        %v290 = vmul.f32 %v278, %v289
        %v291 = vmul.f32 %v245, %v290
        %v292 = vmul.f32 %v291, 1.442695
        %v293 = vpow.pop %v292
        %v294 = vadd.f32 %v293, 1.0
        %v295 = vrcp.pop %v294
        %v296 = vmul.f32 %v294, %v295
        %v297 = vsub.f32 1.0, %v296
        %v298 = vmul.f32 %v295, %v297
        %v299 = vadd.f32 %v295, %v298
        %vm300 = vweird.f32 %v294
        %vm301 = vweird.f32 %v295
        %vm302 = vmor %vm300, %vm301
        %v303 = vsel %vm302, %v295, %v299
        %v304 = vand.u32 2147483647, %v294
        %vm305 = vcmp.eq.f32.partialorder %v304, 8.507059e+37
        %v306 = vand.u32 %v294, 2147483648
        %v307 = vor.u32 1.1754944e-38, %v306
        %v308 = vsel %vm305, %v307, %v303
        %v309 = vmul.f32 1.0, %v308
        %310 = vst [vmem:[%s225] sm:$0x3] %v309
        %s311 = sand.u32 %s100, 1
        %s312 = scalar_lea.sflag [#allocation4], %s311
        %s313 = sand.u32 %s100, 1
        %s314 = smul.addr %s313, 2
        %s315 = scalar_lea.vmem [#allocation7], %s314
        // Predicated region
        $region37: #{tpu_custom_call.1} parent=27 // pred_check
          %p316 = pneg %p110
        $region38: #{tpu_custom_call.1} parent=27 // pred_check_branch
          %318 = sbr.rel (%p316) target = $region40
        $region39: #{tpu_custom_call.1} parent=27 // pred_region
          %320 = vsyncadd %s312, 0
          %s321 = sadd.s32 %s27, %s26
          %s322 = smul.addr %s321, 2
          %s323 = scalar_lea.hbm %s2, %s322
          %s325 = sshll.u32 %s315, 4
          %s326 = int_to_ptr.vmem [resolvable:$true] %s325
          %s327 = sshll.u32 %s323, 4
          %s328 = int_to_ptr.hbm [resolvable:$true] %s327
          %330 = dma.vmem_to_hbm [thread:$0]  %s326, 32, %s328, %s312
        $region40: #{tpu_custom_call.1} parent=27 // pred_fallthru
          _
      $region28: #{tpu_custom_call.1} parent=5 // pred_fallthru
        _
      %p331 = scmp.le.s32.totalorder 2, %s17
      // Predicated region
      $region41: #{tpu_custom_call.1} parent=5 // pred_check
        %p332 = pneg %p331
      $region42: #{tpu_custom_call.1} parent=5 // pred_check_branch
        %334 = sbr.rel (%p332) target = $region44
      $region43: #{tpu_custom_call.1} parent=5 // pred_region
        %s335 = ssub.s32 %s17, 2
        // Predicated region
        $region45: #{tpu_custom_call.1} parent=43 // pred_check
          %p336 = pneg %p116
        $region46: #{tpu_custom_call.1} parent=43 // pred_check_branch
          %338 = sbr.rel (%p336) target = $region48
        $region47: #{tpu_custom_call.1} parent=43 // pred_region
          %s339 = sand.u32 %s101, 1
          %s340 = scalar_lea.sflag [#allocation4], %s339
          %s341 = sand.u32 %s101, 1
          %s342 = smul.addr %s341, 2
          %s343 = scalar_lea.vmem [#allocation7], %s342
          %345 = dma.done %s340, 32
        $region48: #{tpu_custom_call.1} parent=43 // pred_fallthru
          _
      $region44: #{tpu_custom_call.1} parent=5 // pred_fallthru
        _
    $region6: #{tpu_custom_call.1} parent=1 // loop_footer
      %s21 = sadd.s32 1, %s17
    $region7: #{tpu_custom_call.1} parent=1 // loop_footer_branch
      %16 = sbr.rel target = $region3
    $region8: #{tpu_custom_call.1} parent=1 // loop_exit
      _
    %346 = vsyncpa [#allocation3], 1
    %s347 = scalar_lea.sflag [#allocation3], 1
    %348 = vsyncpa %s347, 1
    %349 = vsyncpa [#allocation6], 1
    %s350 = scalar_lea.sflag [#allocation6], 1
    %351 = vsyncpa %s350, 1
    %352 = vsyncpa [#allocation4], 1
    %s353 = scalar_lea.sflag [#allocation4], 1
    %354 = vsyncpa %s353, 1

</llo_original>
